<compile_context>
chip_gen: v6e
topology: v6e:2x2x1
jax: 0.10.0
libtpu: 0.0.40
codegen_flags: <defaults>
</compile_context>

<pallas_src>
import functools

import jax
import jax.numpy as jnp
from jax import lax
from jax.experimental import pallas as pl
from jax.experimental.pallas import tpu as pltpu


def _fused_mha_kernel(x_ref, mask_ref, wqkv_ref, bqkv_ref, wo_ref, bo_ref,
                      out_ref, *attn_out, scale, d_int, d_model, num_heads,
                      compute_dtype, emit_attn):
    """One grid point = one batch element.

    For every head h (static, fully unrolled):
      qkv   = x @ [Wq|Wk|Wv][h] + [bq|bk|bv][h]      (one wide MXU push)
      a     = softmax(mask((q*scale) @ k^T))          (f32 math)
      acc  += (a @ v) @ Wo[h]                         (output proj fused)
    out = acc + bo, written once per batch.
    """
    attn_ref = attn_out[0] if emit_attn else None

    x = x_ref[0]                                   # (S, D)
    key_mask = mask_ref[0]                         # (1, S) over keys
    x_mm = x.astype(compute_dtype)
    S = x.shape[0]

    acc = jnp.zeros((S, d_model), jnp.float32)

    # num_heads is small & static: a Python loop is the fully-unrolled
    # equivalent of lax.fori_loop(unroll=True) and keeps all ref indices static.
    for h in range(num_heads):
        # Fused Q/K/V projection: single (S, D) @ (D, 2*Dint + D) matmul.
        qkv = jnp.dot(x_mm, wqkv_ref[h].astype(compute_dtype),
                      preferred_element_type=jnp.float32) + bqkv_ref[h]
        q = qkv[:, :d_int] * scale                 # fold 1/sqrt(D) into q
        k = qkv[:, d_int:2 * d_int]
        v = qkv[:, 2 * d_int:2 * d_int + d_model]

        # Contract last axes directly; no k.T materialization through the XLU.
        scores = lax.dot_general(q.astype(compute_dtype), k.astype(compute_dtype),
                                 (((1,), (1,)), ((), ())),
                                 preferred_element_type=jnp.float32)

        # Large finite negative (not -inf): avoids NaN on fully-masked rows.
        scores = jnp.where(key_mask == 0, -1e30, scores)

        # Numerically stable softmax in f32.
        m = jnp.max(scores, axis=-1, keepdims=True)
        e = jnp.exp(scores - m)
        denom = jnp.sum(e, axis=-1, keepdims=True)
        a = e * pl.reciprocal(denom, approx=False)  # approx=True on perf path

        if emit_attn:
            attn_ref[0, h] = a

        head_out = jnp.dot(a.astype(compute_dtype), v.astype(compute_dtype),
                           preferred_element_type=jnp.float32)      # (S, D)
        acc = acc + jnp.dot(head_out.astype(compute_dtype),
                            wo_ref[h].astype(compute_dtype),
                            preferred_element_type=jnp.float32)

    out_ref[0] = (acc + bo_ref[...]).astype(out_ref.dtype)


def prepare_params(params):
    """One-time parameter packing (do NOT call per forward)."""
    H, D, Dint = params["wq"].shape
    return {
        # Fuse per-head Q/K/V weights into one wide operand.
        "wqkv": jnp.concatenate([params["wq"], params["wk"], params["wv"]], axis=-1),
        "bqkv": jnp.concatenate([params["bq"], params["bk"], params["bv"]], axis=-1),
        # Split WO into per-head (Dint, D) blocks so the output projection
        # becomes a per-head accumulation inside the kernel.
        "wo": params["wo"].reshape(H, Dint, D),
        "bo": params["bo"],
    }


@functools.partial(jax.jit, static_argnames=("compute_dtype", "return_attention_maps"))
def multi_head_attention(x, mask, prepared, *, compute_dtype=jnp.float32,
                         return_attention_maps=True):
    B, S, D = x.shape
    H, _, F = prepared["wqkv"].shape
    Dint = prepared["wo"].shape[1]
    assert Dint == D, "reference module only type-checks when d_internal == d_model"
    scale = 1.0 / (D ** 0.5)   # torch uses WQ.in_features ** 0.5 == d_model ** 0.5

    mask3 = mask.reshape(B, 1, S)

    kernel = functools.partial(
        _fused_mha_kernel, scale=scale, d_int=Dint, d_model=D, num_heads=H,
        compute_dtype=compute_dtype, emit_attn=return_attention_maps)

    out_struct = jax.ShapeDtypeStruct((B, S, D), x.dtype)
    out_spec = pl.BlockSpec((1, S, D), lambda b: (b, 0, 0))
    if return_attention_maps:
        out_shape = (out_struct, jax.ShapeDtypeStruct((B, H, S, S), jnp.float32))
        out_specs = (out_spec, pl.BlockSpec((1, H, S, S), lambda b: (b, 0, 0, 0)))
    else:
        out_shape = out_struct
        out_specs = out_spec

    results = pl.pallas_call(
        kernel,
        out_shape=out_shape,
        grid=(B,),
        in_specs=[
            pl.BlockSpec((1, S, D), lambda b: (b, 0, 0)),      # x (per batch)
            pl.BlockSpec((1, 1, S), lambda b: (b, 0, 0)),      # key mask (per batch)
            pl.BlockSpec((H, D, F), lambda b: (0, 0, 0)),      # [Wq|Wk|Wv] — resident
            pl.BlockSpec((H, 1, F), lambda b: (0, 0, 0)),      # [bq|bk|bv] — resident
            pl.BlockSpec((H, Dint, D), lambda b: (0, 0, 0)),   # per-head Wo — resident
            pl.BlockSpec((1, D), lambda b: (0, 0)),            # bo — resident
        ],
        out_specs=out_specs,
        compiler_params=pltpu.CompilerParams(
            dimension_semantics=("parallel",)),                # batch shards across TCs (v7x)
    )(x, mask3, prepared["wqkv"], prepared["bqkv"], prepared["wo"], prepared["bo"])

    if return_attention_maps:
        out, attn = results
        attention_maps = [attn[:, h] for h in range(H)]
        return out, attention_maps
    return results, []


def init_params(key, d_model, d_internal, num_heads):
    ks = jax.random.split(key, 8)
    s = 0.05
    return {
        "wq": s * jax.random.normal(ks[0], (num_heads, d_model, d_internal), jnp.float32),
        "bq": s * jax.random.normal(ks[1], (num_heads, 1, d_internal), jnp.float32),
        "wk": s * jax.random.normal(ks[2], (num_heads, d_model, d_internal), jnp.float32),
        "bk": s * jax.random.normal(ks[3], (num_heads, 1, d_internal), jnp.float32),
        "wv": s * jax.random.normal(ks[4], (num_heads, d_model, d_model), jnp.float32),
        "bv": s * jax.random.normal(ks[5], (num_heads, 1, d_model), jnp.float32),
        "wo": s * jax.random.normal(ks[6], (num_heads * d_internal, d_model), jnp.float32),
        "bo": s * jax.random.normal(ks[7], (1, d_model), jnp.float32),
    }


def reference(x, mask, params):
    """Pure-JAX reference mirroring the PyTorch forward."""
    B, S, D = x.shape
    H = params["wq"].shape[0]
    outs, attns = [], []
    for h in range(H):
        q = x @ params["wq"][h] + params["bq"][h]
        k = x @ params["wk"][h] + params["bk"][h]
        v = x @ params["wv"][h] + params["bv"][h]
        sc = (q @ jnp.swapaxes(k, -1, -2)) / (D ** 0.5)
        sc = jnp.where(mask[:, None, :] == 0, -jnp.inf, sc)
        a = jax.nn.softmax(sc, axis=-1)
        outs.append(a @ v)
        attns.append(a)
    y = jnp.concatenate(outs, axis=2) @ params["wo"] + params["bo"]
    return y, attns


if __name__ == "__main__":
    d_model = 32
    d_internal = 32      # must equal d_model for the reference module to be consistent
    num_heads = 2
    batch, seq = 2, 8

    key = jax.random.PRNGKey(0)
    k_x, k_p = jax.random.split(key)
    x = jax.random.normal(k_x, (batch, seq, d_model), jnp.float32)
    # Partial key mask (no row fully masked, matching the reference's -inf semantics).
    mask = jnp.ones((batch, seq), jnp.float32).at[1, -2:].set(0.0)
    params = init_params(k_p, d_model, d_internal, num_heads)
    prepared = prepare_params(params)   # one-time packing, not per forward

    out, attention_maps = multi_head_attention(x, mask, prepared)
    out = jax.block_until_ready(out)
    attention_maps = [jax.block_until_ready(a) for a in attention_maps]

    ref_out, ref_attns = reference(x, mask, params)
    assert jnp.allclose(out, ref_out, atol=1e-5, rtol=1e-5)
    for a, ra in zip(attention_maps, ref_attns):
        assert jnp.allclose(a, ra, atol=1e-5, rtol=1e-5)

    # Also exercise the perf path (no attention-map writeback).
    out2, _ = multi_head_attention(x, mask, prepared, return_attention_maps=False)
    out2 = jax.block_until_ready(out2)
    assert jnp.allclose(out2, ref_out, atol=1e-5, rtol=1e-5)

    print("KERNEL_OK")
</pallas_src>

<mosaic_0001>
module attributes {stable_mosaic.version = 11 : i64} {
  func.func @_fused_mha_kernel(%arg0: i32, %arg1: memref<1x8x32xf32, #tpu.memory_space<vmem>>, %arg2: memref<1x1x8xf32, #tpu.memory_space<vmem>>, %arg3: memref<2x32x96xf32, #tpu.memory_space<vmem>>, %arg4: memref<2x1x96xf32, #tpu.memory_space<vmem>>, %arg5: memref<2x32x32xf32, #tpu.memory_space<vmem>>, %arg6: memref<1x32xf32, #tpu.memory_space<vmem>>, %arg7: memref<1x8x32xf32, #tpu.memory_space<vmem>>, %arg8: memref<1x2x8x8xf32, #tpu.memory_space<vmem>>) attributes {dimension_semantics = [#tpu.dimension_semantics<parallel>], iteration_bounds = array<i64: 2>, scalar_prefetch = 0 : i64, scratch_operands = 0 : i64, tpu.core_type = #tpu.core_type<tc>, window_params = [{transform_indices = @transform_0, window_bounds = array<i64: 1, 8, 32>}, {transform_indices = @transform_1, window_bounds = array<i64: 1, 1, 8>}, {pipeline_mode = #tpu.pipeline_mode<synchronous>, transform_indices = @transform_2, window_bounds = array<i64: 2, 32, 96>}, {pipeline_mode = #tpu.pipeline_mode<synchronous>, transform_indices = @transform_3, window_bounds = array<i64: 2, 1, 96>}, {pipeline_mode = #tpu.pipeline_mode<synchronous>, transform_indices = @transform_4, window_bounds = array<i64: 2, 32, 32>}, {pipeline_mode = #tpu.pipeline_mode<synchronous>, transform_indices = @transform_5, window_bounds = array<i64: 1, 32>}, {transform_indices = @transform_6, window_bounds = array<i64: 1, 8, 32>}, {transform_indices = @transform_7, window_bounds = array<i64: 1, 2, 8, 8>}]} {
    %c0 = arith.constant 0 : index
    %c0_0 = arith.constant 0 : index
    %c0_1 = arith.constant 0 : index
    %0 = vector.load %arg1[%c0, %c0_0, %c0_1] : memref<1x8x32xf32, #tpu.memory_space<vmem>>, vector<1x8x32xf32>
    %1 = vector.shape_cast %0 : vector<1x8x32xf32> to vector<8x32xf32>
    %c0_2 = arith.constant 0 : index
    %c0_3 = arith.constant 0 : index
    %c0_4 = arith.constant 0 : index
    %2 = vector.load %arg2[%c0_2, %c0_3, %c0_4] : memref<1x1x8xf32, #tpu.memory_space<vmem>>, vector<1x1x8xf32>
    %3 = vector.shape_cast %2 : vector<1x1x8xf32> to vector<1x8xf32>
    %cst = arith.constant 0.000000e+00 : f32
    %4 = vector.broadcast %cst : f32 to vector<8x32xf32>
    %c0_5 = arith.constant 0 : index
    %c0_6 = arith.constant 0 : index
    %c0_7 = arith.constant 0 : index
    %5 = vector.load %arg3[%c0_5, %c0_6, %c0_7] : memref<2x32x96xf32, #tpu.memory_space<vmem>>, vector<1x32x96xf32>
    %6 = vector.shape_cast %5 : vector<1x32x96xf32> to vector<32x96xf32>
    %cst_8 = arith.constant dense<0.000000e+00> : vector<8x96xf32>
    %7 = tpu.matmul %1, %6, %cst_8 {dimension_numbers = #tpu.dot_dimension_numbers<[1], [0], [0], [1], [0, 0, 1, 1], [], []>} : vector<8x32xf32>, vector<32x96xf32>, vector<8x96xf32> -> vector<8x96xf32>
    %c0_9 = arith.constant 0 : index
    %c0_10 = arith.constant 0 : index
    %c0_11 = arith.constant 0 : index
    %8 = vector.load %arg4[%c0_9, %c0_10, %c0_11] : memref<2x1x96xf32, #tpu.memory_space<vmem>>, vector<1x1x96xf32>
    %9 = vector.shape_cast %8 : vector<1x1x96xf32> to vector<1x96xf32>
    %10 = vector.broadcast %9 : vector<1x96xf32> to vector<8x96xf32>
    %11 = arith.addf %7, %10 : vector<8x96xf32>
    %12 = vector.extract_strided_slice %11 {offsets = [0, 0], sizes = [8, 32], strides = [1, 1]} : vector<8x96xf32> to vector<8x32xf32>
    %cst_12 = arith.constant 0.176776692 : f32
    %13 = vector.broadcast %cst_12 : f32 to vector<8x32xf32>
    %14 = arith.mulf %12, %13 : vector<8x32xf32>
    %15 = vector.extract_strided_slice %11 {offsets = [0, 32], sizes = [8, 32], strides = [1, 1]} : vector<8x96xf32> to vector<8x32xf32>
    %16 = vector.extract_strided_slice %11 {offsets = [0, 64], sizes = [8, 32], strides = [1, 1]} : vector<8x96xf32> to vector<8x32xf32>
    %cst_13 = arith.constant dense<0.000000e+00> : vector<8x8xf32>
    %17 = tpu.matmul %14, %15, %cst_13 {dimension_numbers = #tpu.dot_dimension_numbers<[1], [1], [0], [0], [0, 0, 1, 0], [], []>} : vector<8x32xf32>, vector<8x32xf32>, vector<8x8xf32> -> vector<8x8xf32>
    %cst_14 = arith.constant 0.000000e+00 : f32
    %18 = vector.broadcast %cst_14 : f32 to vector<1x8xf32>
    %19 = arith.cmpf oeq, %3, %18 : vector<1x8xf32>
    %cst_15 = arith.constant -1.000000e+30 : f32
    %20 = vector.shape_cast %19 : vector<1x8xi1> to vector<1x8xi1>
    %21 = vector.broadcast %20 : vector<1x8xi1> to vector<8x8xi1>
    %22 = vector.broadcast %cst_15 : f32 to vector<8x8xf32>
    %23 = arith.select %21, %22, %17 : vector<8x8xi1>, vector<8x8xf32>
    %cst_16 = arith.constant dense<0xFF800000> : vector<8xf32>
    %24 = vector.multi_reduction <maximumf>, %23, %cst_16 [1] : vector<8x8xf32> to vector<8xf32>
    %25 = vector.shape_cast %24 : vector<8xf32> to vector<8x1xf32>
    %26 = vector.broadcast %25 : vector<8x1xf32> to vector<8x8xf32>
    %27 = arith.subf %23, %26 : vector<8x8xf32>
    %28 = math.exp %27 : vector<8x8xf32>
    %cst_17 = arith.constant dense<0.000000e+00> : vector<8xf32>
    %29 = vector.multi_reduction <add>, %28, %cst_17 [1] : vector<8x8xf32> to vector<8xf32>
    %30 = vector.shape_cast %29 : vector<8xf32> to vector<8x1xf32>
    %31 = tpu.reciprocal %30 : vector<8x1xf32> -> vector<8x1xf32>
    %32 = vector.broadcast %31 : vector<8x1xf32> to vector<8x8xf32>
    %33 = arith.mulf %28, %32 : vector<8x8xf32>
    %c0_18 = arith.constant 0 : index
    %c0_19 = arith.constant 0 : index
    %c0_20 = arith.constant 0 : index
    %c0_21 = arith.constant 0 : index
    %34 = vector.load %arg8[%c0_18, %c0_19, %c0_20, %c0_21] : memref<1x2x8x8xf32, #tpu.memory_space<vmem>>, vector<1x1x8x8xf32>
    %35 = vector.shape_cast %34 : vector<1x1x8x8xf32> to vector<8x8xf32>
    %36 = vector.shape_cast %33 : vector<8x8xf32> to vector<1x1x8x8xf32>
    tpu.vector_store %arg8[%c0_18, %c0_19, %c0_20, %c0_21], %36 {strides = array<i32>} : memref<1x2x8x8xf32, #tpu.memory_space<vmem>>, vector<1x1x8x8xf32>,
    %cst_22 = arith.constant dense<0.000000e+00> : vector<8x32xf32>
    %37 = tpu.matmul %33, %16, %cst_22 {dimension_numbers = #tpu.dot_dimension_numbers<[1], [0], [0], [1], [0, 0, 1, 1], [], []>} : vector<8x8xf32>, vector<8x32xf32>, vector<8x32xf32> -> vector<8x32xf32>
    %c0_23 = arith.constant 0 : index
    %c0_24 = arith.constant 0 : index
    %c0_25 = arith.constant 0 : index
    %38 = vector.load %arg5[%c0_23, %c0_24, %c0_25] : memref<2x32x32xf32, #tpu.memory_space<vmem>>, vector<1x32x32xf32>
    %39 = vector.shape_cast %38 : vector<1x32x32xf32> to vector<32x32xf32>
    %cst_26 = arith.constant dense<0.000000e+00> : vector<8x32xf32>
    %40 = tpu.matmul %37, %39, %cst_26 {dimension_numbers = #tpu.dot_dimension_numbers<[1], [0], [0], [1], [0, 0, 1, 1], [], []>} : vector<8x32xf32>, vector<32x32xf32>, vector<8x32xf32> -> vector<8x32xf32>
    %41 = arith.addf %4, %40 : vector<8x32xf32>
    %c1 = arith.constant 1 : index
    %c0_27 = arith.constant 0 : index
    %c0_28 = arith.constant 0 : index
    %42 = vector.load %arg3[%c1, %c0_27, %c0_28] : memref<2x32x96xf32, #tpu.memory_space<vmem>>, vector<1x32x96xf32>
    %43 = vector.shape_cast %42 : vector<1x32x96xf32> to vector<32x96xf32>
    %cst_29 = arith.constant dense<0.000000e+00> : vector<8x96xf32>
    %44 = tpu.matmul %1, %43, %cst_29 {dimension_numbers = #tpu.dot_dimension_numbers<[1], [0], [0], [1], [0, 0, 1, 1], [], []>} : vector<8x32xf32>, vector<32x96xf32>, vector<8x96xf32> -> vector<8x96xf32>
    %c1_30 = arith.constant 1 : index
    %c0_31 = arith.constant 0 : index
    %c0_32 = arith.constant 0 : index
    %45 = vector.load %arg4[%c1_30, %c0_31, %c0_32] : memref<2x1x96xf32, #tpu.memory_space<vmem>>, vector<1x1x96xf32>
    %46 = vector.shape_cast %45 : vector<1x1x96xf32> to vector<1x96xf32>
    %47 = vector.broadcast %46 : vector<1x96xf32> to vector<8x96xf32>
    %48 = arith.addf %44, %47 : vector<8x96xf32>
    %49 = vector.extract_strided_slice %48 {offsets = [0, 0], sizes = [8, 32], strides = [1, 1]} : vector<8x96xf32> to vector<8x32xf32>
    %cst_33 = arith.constant 0.176776692 : f32
    %50 = vector.broadcast %cst_33 : f32 to vector<8x32xf32>
    %51 = arith.mulf %49, %50 : vector<8x32xf32>
    %52 = vector.extract_strided_slice %48 {offsets = [0, 32], sizes = [8, 32], strides = [1, 1]} : vector<8x96xf32> to vector<8x32xf32>
    %53 = vector.extract_strided_slice %48 {offsets = [0, 64], sizes = [8, 32], strides = [1, 1]} : vector<8x96xf32> to vector<8x32xf32>
    %cst_34 = arith.constant dense<0.000000e+00> : vector<8x8xf32>
    %54 = tpu.matmul %51, %52, %cst_34 {dimension_numbers = #tpu.dot_dimension_numbers<[1], [1], [0], [0], [0, 0, 1, 0], [], []>} : vector<8x32xf32>, vector<8x32xf32>, vector<8x8xf32> -> vector<8x8xf32>
    %cst_35 = arith.constant 0.000000e+00 : f32
    %55 = vector.broadcast %cst_35 : f32 to vector<1x8xf32>
    %56 = arith.cmpf oeq, %3, %55 : vector<1x8xf32>
    %cst_36 = arith.constant -1.000000e+30 : f32
    %57 = vector.shape_cast %56 : vector<1x8xi1> to vector<1x8xi1>
    %58 = vector.broadcast %57 : vector<1x8xi1> to vector<8x8xi1>
    %59 = vector.broadcast %cst_36 : f32 to vector<8x8xf32>
    %60 = arith.select %58, %59, %54 : vector<8x8xi1>, vector<8x8xf32>
    %cst_37 = arith.constant dense<0xFF800000> : vector<8xf32>
    %61 = vector.multi_reduction <maximumf>, %60, %cst_37 [1] : vector<8x8xf32> to vector<8xf32>
    %62 = vector.shape_cast %61 : vector<8xf32> to vector<8x1xf32>
    %63 = vector.broadcast %62 : vector<8x1xf32> to vector<8x8xf32>
    %64 = arith.subf %60, %63 : vector<8x8xf32>
    %65 = math.exp %64 : vector<8x8xf32>
    %cst_38 = arith.constant dense<0.000000e+00> : vector<8xf32>
    %66 = vector.multi_reduction <add>, %65, %cst_38 [1] : vector<8x8xf32> to vector<8xf32>
    %67 = vector.shape_cast %66 : vector<8xf32> to vector<8x1xf32>
    %68 = tpu.reciprocal %67 : vector<8x1xf32> -> vector<8x1xf32>
    %69 = vector.broadcast %68 : vector<8x1xf32> to vector<8x8xf32>
    %70 = arith.mulf %65, %69 : vector<8x8xf32>
    %c0_39 = arith.constant 0 : index
    %c1_40 = arith.constant 1 : index
    %c0_41 = arith.constant 0 : index
    %c0_42 = arith.constant 0 : index
    %71 = vector.load %arg8[%c0_39, %c1_40, %c0_41, %c0_42] : memref<1x2x8x8xf32, #tpu.memory_space<vmem>>, vector<1x1x8x8xf32>
    %72 = vector.shape_cast %71 : vector<1x1x8x8xf32> to vector<8x8xf32>
    %73 = vector.shape_cast %70 : vector<8x8xf32> to vector<1x1x8x8xf32>
    tpu.vector_store %arg8[%c0_39, %c1_40, %c0_41, %c0_42], %73 {strides = array<i32>} : memref<1x2x8x8xf32, #tpu.memory_space<vmem>>, vector<1x1x8x8xf32>,
    %cst_43 = arith.constant dense<0.000000e+00> : vector<8x32xf32>
    %74 = tpu.matmul %70, %53, %cst_43 {dimension_numbers = #tpu.dot_dimension_numbers<[1], [0], [0], [1], [0, 0, 1, 1], [], []>} : vector<8x8xf32>, vector<8x32xf32>, vector<8x32xf32> -> vector<8x32xf32>
    %c1_44 = arith.constant 1 : index
    %c0_45 = arith.constant 0 : index
    %c0_46 = arith.constant 0 : index
    %75 = vector.load %arg5[%c1_44, %c0_45, %c0_46] : memref<2x32x32xf32, #tpu.memory_space<vmem>>, vector<1x32x32xf32>
    %76 = vector.shape_cast %75 : vector<1x32x32xf32> to vector<32x32xf32>
    %cst_47 = arith.constant dense<0.000000e+00> : vector<8x32xf32>
    %77 = tpu.matmul %74, %76, %cst_47 {dimension_numbers = #tpu.dot_dimension_numbers<[1], [0], [0], [1], [0, 0, 1, 1], [], []>} : vector<8x32xf32>, vector<32x32xf32>, vector<8x32xf32> -> vector<8x32xf32>
    %78 = arith.addf %41, %77 : vector<8x32xf32>
    %c0_48 = arith.constant 0 : index
    %c0_49 = arith.constant 0 : index
    %79 = vector.load %arg6[%c0_48, %c0_49] : memref<1x32xf32, #tpu.memory_space<vmem>>, vector<1x32xf32>
    %80 = vector.broadcast %79 : vector<1x32xf32> to vector<8x32xf32>
    %81 = arith.addf %78, %80 : vector<8x32xf32>
    %c0_50 = arith.constant 0 : index
    %c0_51 = arith.constant 0 : index
    %c0_52 = arith.constant 0 : index
    %82 = vector.load %arg7[%c0_50, %c0_51, %c0_52] : memref<1x8x32xf32, #tpu.memory_space<vmem>>, vector<1x8x32xf32>
    %83 = vector.shape_cast %82 : vector<1x8x32xf32> to vector<8x32xf32>
    %84 = vector.shape_cast %81 : vector<8x32xf32> to vector<1x8x32xf32>
    tpu.vector_store %arg7[%c0_50, %c0_51, %c0_52], %84 {strides = array<i32>} : memref<1x8x32xf32, #tpu.memory_space<vmem>>, vector<1x8x32xf32>,
    return
  }
  func.func @transform_0(%arg0: i32) -> (i32, i32, i32) {
    %c0_i32 = arith.constant 0 : i32
    %c0_i32_0 = arith.constant 0 : i32
    %c0_i32_1 = arith.constant 0 : i32
    return %arg0, %c0_i32, %c0_i32_0 : i32, i32, i32
  }
  func.func @transform_1(%arg0: i32) -> (i32, i32, i32) {
    %c0_i32 = arith.constant 0 : i32
    %c0_i32_0 = arith.constant 0 : i32
    %c0_i32_1 = arith.constant 0 : i32
    return %arg0, %c0_i32, %c0_i32_0 : i32, i32, i32
  }
  func.func @transform_2(%arg0: i32) -> (i32, i32, i32) {
    %c0_i32 = arith.constant 0 : i32
    %c0_i32_0 = arith.constant 0 : i32
    %c0_i32_1 = arith.constant 0 : i32
    %c0_i32_2 = arith.constant 0 : i32
    return %c0_i32, %c0_i32_0, %c0_i32_1 : i32, i32, i32
  }
  func.func @transform_3(%arg0: i32) -> (i32, i32, i32) {
    %c0_i32 = arith.constant 0 : i32
    %c0_i32_0 = arith.constant 0 : i32
    %c0_i32_1 = arith.constant 0 : i32
    %c0_i32_2 = arith.constant 0 : i32
    return %c0_i32, %c0_i32_0, %c0_i32_1 : i32, i32, i32
  }
  func.func @transform_4(%arg0: i32) -> (i32, i32, i32) {
    %c0_i32 = arith.constant 0 : i32
    %c0_i32_0 = arith.constant 0 : i32
    %c0_i32_1 = arith.constant 0 : i32
    %c0_i32_2 = arith.constant 0 : i32
    return %c0_i32, %c0_i32_0, %c0_i32_1 : i32, i32, i32
  }
  func.func @transform_5(%arg0: i32) -> (i32, i32) {
    %c0_i32 = arith.constant 0 : i32
    %c0_i32_0 = arith.constant 0 : i32
    %c0_i32_1 = arith.constant 0 : i32
    return %c0_i32, %c0_i32_0 : i32, i32
  }
  func.func @transform_6(%arg0: i32) -> (i32, i32, i32) {
    %c0_i32 = arith.constant 0 : i32
    %c0_i32_0 = arith.constant 0 : i32
    %c0_i32_1 = arith.constant 0 : i32
    return %arg0, %c0_i32, %c0_i32_0 : i32, i32, i32
  }
  func.func @transform_7(%arg0: i32) -> (i32, i32, i32, i32) {
    %c0_i32 = arith.constant 0 : i32
    %c0_i32_0 = arith.constant 0 : i32
    %c0_i32_1 = arith.constant 0 : i32
    %c0_i32_2 = arith.constant 0 : i32
    return %arg0, %c0_i32, %c0_i32_0, %c0_i32_1 : i32, i32, i32, i32
  }
}

</mosaic_0001>

<llo_original>
// kernel: multi_head_attention.1
$region0: #{multi_head_attention.1}
  #allocation0 [shape = 'u32[]', space=smem, size = 0x4, offset = 0x4, fixed_abs, tag = 'smem constant byte address 0x4 - core index']
  #allocation1 [shape = 'u32[144,128]{1,0:T(1,128)}', space=vmem, size = 0x12000, scoped, tag = 'internal scratch']
  %s0 = inlined_call_operand.hbm [shape: f32[2,8,32], index: 0, kind: input, shape index: {}]
  %s1 = inlined_call_operand.vmem [shape: f32[2,1,8], index: 1, kind: input, shape index: {}]
  %s2 = inlined_call_operand.hbm [shape: f32[2,32,96], index: 2, kind: input, shape index: {}]
  %s3 = inlined_call_operand.vmem [shape: f32[2,1,96], index: 3, kind: input, shape index: {}]
  %s4 = inlined_call_operand.hbm [shape: f32[2,32,32], index: 4, kind: input, shape index: {}]
  %s5 = inlined_call_operand.vmem [shape: f32[1,32], index: 5, kind: input, shape index: {}]
  %s6 = inlined_call_operand.hbm [shape: f32[2,8,32], index: 6, kind: output, shape index: {0}]
  %s7 = inlined_call_operand.vmem [shape: f32[2,2,8,8], index: 7, kind: output, shape index: {1}]
  %8 = xla_tuple %s6, %s7
  %s9 = sld [smem:[#allocation0]]
  $region77: #{multi_head_attention.1} parent=0
    _
  %s11 = ssub.s32 1, %s9
  %s12 = scalar_select 0, %s11, %s9
  $region1: #{multi_head_attention.1} parent=0
    #allocation2 [shape = 'u8[8192]{0}', space=vmem, size = 0x2000, scoped, tag = 'input window, operand 0']
    #allocation3 [shape = 's32[2]{0}', space=sflag, size = 0x8, scoped, tag = 'scoped memory for multi_head_attention.1']
    #allocation4 [shape = 's32[2]{0}', space=sflag, size = 0x8, scoped, tag = 'scoped memory for multi_head_attention.1']
    #allocation5 [shape = 'u8[32768]{0}', space=vmem, size = 0x8000, scoped, tag = 'input window, operand 2, single buffered']
    #allocation6 [shape = 's32[1]{0}', space=sflag, size = 0x4, scoped, tag = 'scoped memory for multi_head_attention.1']
    #allocation7 [shape = 'u8[32768]{0}', space=vmem, size = 0x8000, scoped, tag = 'input window, operand 4, single buffered']
    #allocation8 [shape = 'u8[8192]{0}', space=vmem, size = 0x2000, scoped, tag = 'output window, operand 0']
    %13 = vsyncpa [#allocation3], 0
    %s14 = scalar_lea.sflag [#allocation3], 1
    %15 = vsyncpa %s14, 0
    %16 = vsyncpa [#allocation6], 0
    %17 = vsyncpa [#allocation4], 0
    %s18 = scalar_lea.sflag [#allocation4], 1
    %19 = vsyncpa %s18, 0
    loop: start=0, step=1, limit=4
    $region2: #{multi_head_attention.1} parent=1 // loop_pre_header
      _
    $region3: #{multi_head_attention.1} parent=1 // loop_header
      %s21 = sphi 0, %s25
      %p22 = scmp.ge.s32.totalorder %s21, 4
      %s31 = sphi 0, %s33
      %s34 = sphi 0, %s31
      %s35 = sphi 0, %s34
      %s51 = sphi 0, %s35
      %s57 = sphi 0, %s59
      %s60 = sphi 0, %s57
      %s61 = sphi 0, %s60
      %s77 = sphi 0, %s61
      %s81 = sphi 0, %s81
      %s83 = sphi 0, %s81
      %s84 = sphi 0, %s83
      %s98 = sphi 0, %s84
      %s102 = sphi 0, %s102
      %s104 = sphi 0, %s102
      %s105 = sphi 0, %s104
      %s119 = sphi 0, %s105
      %s123 = sphi 0, %s123
      %s125 = sphi 0, %s123
      %s126 = sphi 0, %s125
      %s140 = sphi 0, %s126
      %s144 = sphi 0, %s144
      %s146 = sphi 0, %s144
      %s147 = sphi 0, %s146
      %s161 = sphi 0, %s147
      %s167 = sphi 0, %s169
      %s170 = sphi 0, %s167
      %s171 = sphi 0, %s170
      %s187 = sphi 0, %s171
      %s193 = sphi 0, %s195
      %s196 = sphi 0, %s193
      %s197 = sphi 0, %s196
      %s213 = sphi 0, %s197
    $region4: #{multi_head_attention.1} parent=1 // loop_header_branch
      %24 = sbr.rel (%p22) target = $region8
    $region5: #{multi_head_attention.1} parent=1 // loop_body
      %s26 = ssub.s32 %s21, 1
      %s27 = ssub.s32 %s21, 2
      %s28 = sadd.s32 %s21, 1
      %s29 = ssub.s32 %s21, %s28
      %p30 = scmp.eq.s32.totalorder %s29, 0
      %s32 = sadd.s32 %s31, 1
      %s33 = scalar_select %p30, %s31, %s32
      %p36 = pneg %p30
      %p37 = scmp.eq.s32.totalorder %s21, 1
      %p38 = por %p36, %p37
      %p39 = scmp.ne.s32.totalorder %s31, %s34
      %p40 = scmp.eq.s32.totalorder %s21, 0
      %p41 = por %p39, %p40
      %p42 = scmp.ne.s32.totalorder %s31, %s34
      %p43 = scmp.eq.s32.totalorder %s26, 1
      %p44 = por %p42, %p43
      %p45 = scmp.ne.s32.totalorder %s34, %s35
      %p46 = scmp.eq.s32.totalorder %s26, 0
      %p47 = por %p45, %p46
      %p48 = scmp.ne.s32.totalorder %s34, %s35
      %p49 = scmp.eq.s32.totalorder %s27, 1
      %p50 = por %p48, %p49
      %p52 = scmp.ne.s32.totalorder %s35, %s51
      %p53 = scmp.eq.s32.totalorder %s27, 0
      %p54 = por %p52, %p53
      %s55 = ssub.s32 %s21, %s28
      %p56 = scmp.eq.s32.totalorder %s55, 0
      %s58 = sadd.s32 %s57, 1
      %s59 = scalar_select %p56, %s57, %s58
      %p62 = pneg %p56
      %p63 = scmp.eq.s32.totalorder %s21, 1
      %p64 = por %p62, %p63
      %p65 = scmp.ne.s32.totalorder %s57, %s60
      %p66 = scmp.eq.s32.totalorder %s21, 0
      %p67 = por %p65, %p66
      %p68 = scmp.ne.s32.totalorder %s57, %s60
      %p69 = scmp.eq.s32.totalorder %s26, 1
      %p70 = por %p68, %p69
      %p71 = scmp.ne.s32.totalorder %s60, %s61
      %p72 = scmp.eq.s32.totalorder %s26, 0
      %p73 = por %p71, %p72
      %p74 = scmp.ne.s32.totalorder %s60, %s61
      %p75 = scmp.eq.s32.totalorder %s27, 1
      %p76 = por %p74, %p75
      %p78 = scmp.ne.s32.totalorder %s61, %s77
      %p79 = scmp.eq.s32.totalorder %s27, 0
      %p80 = por %p78, %p79
      %s82 = sadd.s32 %s81, 1
      %p85 = scmp.eq.s32.totalorder %s21, 1
      %p86 = scmp.ne.s32.totalorder %s81, %s83
      %p87 = scmp.eq.s32.totalorder %s21, 0
      %p88 = por %p86, %p87
      %p89 = scmp.ne.s32.totalorder %s81, %s83
      %p90 = scmp.eq.s32.totalorder %s26, 1
      %p91 = por %p89, %p90
      %p92 = scmp.ne.s32.totalorder %s83, %s84
      %p93 = scmp.eq.s32.totalorder %s26, 0
      %p94 = por %p92, %p93
      %p95 = scmp.ne.s32.totalorder %s83, %s84
      %p96 = scmp.eq.s32.totalorder %s27, 1
      %p97 = por %p95, %p96
      %p99 = scmp.ne.s32.totalorder %s84, %s98
      %p100 = scmp.eq.s32.totalorder %s27, 0
      %p101 = por %p99, %p100
      %s103 = sadd.s32 %s102, 1
      %p106 = scmp.eq.s32.totalorder %s21, 1
      %p107 = scmp.ne.s32.totalorder %s102, %s104
      %p108 = scmp.eq.s32.totalorder %s21, 0
      %p109 = por %p107, %p108
      %p110 = scmp.ne.s32.totalorder %s102, %s104
      %p111 = scmp.eq.s32.totalorder %s26, 1
      %p112 = por %p110, %p111
      %p113 = scmp.ne.s32.totalorder %s104, %s105
      %p114 = scmp.eq.s32.totalorder %s26, 0
      %p115 = por %p113, %p114
      %p116 = scmp.ne.s32.totalorder %s104, %s105
      %p117 = scmp.eq.s32.totalorder %s27, 1
      %p118 = por %p116, %p117
      %p120 = scmp.ne.s32.totalorder %s105, %s119
      %p121 = scmp.eq.s32.totalorder %s27, 0
      %p122 = por %p120, %p121
      %s124 = sadd.s32 %s123, 1
      %p127 = scmp.eq.s32.totalorder %s21, 1
      %p128 = scmp.ne.s32.totalorder %s123, %s125
      %p129 = scmp.eq.s32.totalorder %s21, 0
      %p130 = por %p128, %p129
      %p131 = scmp.ne.s32.totalorder %s123, %s125
      %p132 = scmp.eq.s32.totalorder %s26, 1
      %p133 = por %p131, %p132
      %p134 = scmp.ne.s32.totalorder %s125, %s126
      %p135 = scmp.eq.s32.totalorder %s26, 0
      %p136 = por %p134, %p135
      %p137 = scmp.ne.s32.totalorder %s125, %s126
      %p138 = scmp.eq.s32.totalorder %s27, 1
      %p139 = por %p137, %p138
      %p141 = scmp.ne.s32.totalorder %s126, %s140
      %p142 = scmp.eq.s32.totalorder %s27, 0
      %p143 = por %p141, %p142
      %s145 = sadd.s32 %s144, 1
      %p148 = scmp.eq.s32.totalorder %s21, 1
      %p149 = scmp.ne.s32.totalorder %s144, %s146
      %p150 = scmp.eq.s32.totalorder %s21, 0
      %p151 = por %p149, %p150
      %p152 = scmp.ne.s32.totalorder %s144, %s146
      %p153 = scmp.eq.s32.totalorder %s26, 1
      %p154 = por %p152, %p153
      %p155 = scmp.ne.s32.totalorder %s146, %s147
      %p156 = scmp.eq.s32.totalorder %s26, 0
      %p157 = por %p155, %p156
      %p158 = scmp.ne.s32.totalorder %s146, %s147
      %p159 = scmp.eq.s32.totalorder %s27, 1
      %p160 = por %p158, %p159
      %p162 = scmp.ne.s32.totalorder %s147, %s161
      %p163 = scmp.eq.s32.totalorder %s27, 0
      %p164 = por %p162, %p163
      %s165 = ssub.s32 %s21, %s28
      %p166 = scmp.eq.s32.totalorder %s165, 0
      %s168 = sadd.s32 %s167, 1
      %s169 = scalar_select %p166, %s167, %s168
      %p172 = pneg %p166
      %p173 = scmp.eq.s32.totalorder %s21, 1
      %p174 = por %p172, %p173
      %p175 = scmp.ne.s32.totalorder %s167, %s170
      %p176 = scmp.eq.s32.totalorder %s21, 0
      %p177 = por %p175, %p176
      %p178 = scmp.ne.s32.totalorder %s167, %s170
      %p179 = scmp.eq.s32.totalorder %s26, 1
      %p180 = por %p178, %p179
      %p181 = scmp.ne.s32.totalorder %s170, %s171
      %p182 = scmp.eq.s32.totalorder %s26, 0
      %p183 = por %p181, %p182
      %p184 = scmp.ne.s32.totalorder %s170, %s171
      %p185 = scmp.eq.s32.totalorder %s27, 1
      %p186 = por %p184, %p185
      %p188 = scmp.ne.s32.totalorder %s171, %s187
      %p189 = scmp.eq.s32.totalorder %s27, 0
      %p190 = por %p188, %p189
      %s191 = ssub.s32 %s21, %s28
      %p192 = scmp.eq.s32.totalorder %s191, 0
      %s194 = sadd.s32 %s193, 1
      %s195 = scalar_select %p192, %s193, %s194
      %p198 = pneg %p192
      %p199 = scmp.eq.s32.totalorder %s21, 1
      %p200 = por %p198, %p199
      %p201 = scmp.ne.s32.totalorder %s193, %s196
      %p202 = scmp.eq.s32.totalorder %s21, 0
      %p203 = por %p201, %p202
      %p204 = scmp.ne.s32.totalorder %s193, %s196
      %p205 = scmp.eq.s32.totalorder %s26, 1
      %p206 = por %p204, %p205
      %p207 = scmp.ne.s32.totalorder %s196, %s197
      %p208 = scmp.eq.s32.totalorder %s26, 0
      %p209 = por %p207, %p208
      %p210 = scmp.ne.s32.totalorder %s196, %s197
      %p211 = scmp.eq.s32.totalorder %s27, 1
      %p212 = por %p210, %p211
      %p214 = scmp.ne.s32.totalorder %s197, %s213
      %p215 = scmp.eq.s32.totalorder %s27, 0
      %p216 = por %p214, %p215
      %p217 = scmp.le.s32.totalorder 1, %s21
      %p218 = scmp.lt.s32.totalorder %s21, 3
      %p219 = pnand %p217, %p218
      %p220 = pneg %p219
      // Predicated region
      $region9: #{multi_head_attention.1} parent=5 // pred_check
        _
      $region10: #{multi_head_attention.1} parent=5 // pred_check_branch
        %222 = sbr.rel (%p219) target = $region12
      $region11: #{multi_head_attention.1} parent=5 // pred_region
        %s223 = ssub.s32 %s21, 1
        // Predicated region
        $region13: #{multi_head_attention.1} parent=11 // pred_check
          %p224 = pneg %p94
        $region14: #{multi_head_attention.1} parent=11 // pred_check_branch
          %226 = sbr.rel (%p224) target = $region16
        $region15: #{multi_head_attention.1} parent=11 // pred_region
          %s228 = ssub.s32 1024, 1024
          %229 = vsyncadd [#allocation6], %s228
          %s230 = sshll.u32 [#allocation5], 4
          %s231 = int_to_ptr.vmem [resolvable:$true] %s230
          %236 = dma.hbm_to_vmem [thread:$0]  %s2, 1024, %s231, [#allocation6], 128, 128, 8
        $region16: #{multi_head_attention.1} parent=11 // pred_fallthru
          _
        // Predicated region
        $region17: #{multi_head_attention.1} parent=11 // pred_check
          %p237 = pneg %p115
        $region18: #{multi_head_attention.1} parent=11 // pred_check_branch
          %239 = sbr.rel (%p237) target = $region20
        $region19: #{multi_head_attention.1} parent=11 // pred_region
          _
        $region20: #{multi_head_attention.1} parent=11 // pred_fallthru
          _
        // Predicated region
        $region21: #{multi_head_attention.1} parent=11 // pred_check
          %p240 = pneg %p136
        $region22: #{multi_head_attention.1} parent=11 // pred_check_branch
          %242 = sbr.rel (%p240) target = $region24
        $region23: #{multi_head_attention.1} parent=11 // pred_region
          %s244 = ssub.s32 1024, 1024
          %245 = vsyncadd [#allocation6], %s244
          %s246 = sshll.u32 [#allocation7], 4
          %s247 = int_to_ptr.vmem [resolvable:$true] %s246
          %252 = dma.hbm_to_vmem [thread:$0]  %s4, 1024, %s247, [#allocation6], 128, 128, 8
        $region24: #{multi_head_attention.1} parent=11 // pred_fallthru
          _
        // Predicated region
        $region25: #{multi_head_attention.1} parent=11 // pred_check
          %p253 = pneg %p157
        $region26: #{multi_head_attention.1} parent=11 // pred_check_branch
          %255 = sbr.rel (%p253) target = $region28
        $region27: #{multi_head_attention.1} parent=11 // pred_region
          _
        $region28: #{multi_head_attention.1} parent=11 // pred_fallthru
          _
      $region12: #{multi_head_attention.1} parent=5 // pred_fallthru
        _
      %p256 = scmp.lt.s32.totalorder %s21, 2
      // Predicated region
      $region29: #{multi_head_attention.1} parent=5 // pred_check
        %p257 = pneg %p256
      $region30: #{multi_head_attention.1} parent=5 // pred_check_branch
        %259 = sbr.rel (%p257) target = $region32
      $region31: #{multi_head_attention.1} parent=5 // pred_region
        // Predicated region
        $region33: #{multi_head_attention.1} parent=31 // pred_check
          %p260 = pneg %p41
        $region34: #{multi_head_attention.1} parent=31 // pred_check_branch
          %262 = sbr.rel (%p260) target = $region36
        $region35: #{multi_head_attention.1} parent=31 // pred_region
          %s263 = sand.u32 %s31, 1
          %s264 = scalar_lea.sflag [#allocation3], %s263
          %s265 = sand.u32 %s31, 1
          %s266 = smul.addr %s265, 8
          %s267 = scalar_lea.vmem [#allocation2], %s266
          %s269 = ssub.s32 128, 128
          %270 = vsyncadd %s264, %s269
          %s271 = smul.addr %s21, 128
          %s272 = scalar_lea.hbm %s0, %s271
          %s274 = sshll.u32 %s267, 4
          %s275 = int_to_ptr.vmem [resolvable:$true] %s274
          %277 = dma.hbm_to_vmem [thread:$0]  %s272, 128, %s275, %s264
        $region36: #{multi_head_attention.1} parent=31 // pred_fallthru
          _
        // Predicated region
        $region37: #{multi_head_attention.1} parent=31 // pred_check
          %p278 = pneg %p67
        $region38: #{multi_head_attention.1} parent=31 // pred_check_branch
          %280 = sbr.rel (%p278) target = $region40
        $region39: #{multi_head_attention.1} parent=31 // pred_region
          %p281 = scmp.lt.s32.totalorder %s21, 1
          %s282 = scalar_select %p281, %s21, 1
          %s283 = scalar_lea.vmem %s1, %s282
        $region40: #{multi_head_attention.1} parent=31 // pred_fallthru
          _
      $region32: #{multi_head_attention.1} parent=5 // pred_fallthru
        _
      %p284 = scmp.le.s32.totalorder 1, %s21
      %p285 = scmp.lt.s32.totalorder %s21, 3
      %p286 = pnand %p284, %p285
      %p287 = pneg %p286
      // Predicated region
      $region41: #{multi_head_attention.1} parent=5 // pred_check
        _
      $region42: #{multi_head_attention.1} parent=5 // pred_check_branch
        %289 = sbr.rel (%p286) target = $region44
      $region43: #{multi_head_attention.1} parent=5 // pred_region
        %s290 = ssub.s32 %s21, 1
        %s291 = sand.u32 %s34, 1
        %s292 = scalar_lea.sflag [#allocation3], %s291
        %s293 = sand.u32 %s34, 1
        %s294 = smul.addr %s293, 8
        %s295 = scalar_lea.vmem [#allocation2], %s294
        // Predicated region
        $region45: #{multi_head_attention.1} parent=43 // pred_check
          %p296 = pneg %p47
        $region46: #{multi_head_attention.1} parent=43 // pred_check_branch
          %298 = sbr.rel (%p296) target = $region48
        $region47: #{multi_head_attention.1} parent=43 // pred_region
          %299 = dma.done %s292, 128
        $region48: #{multi_head_attention.1} parent=43 // pred_fallthru
          _
        // Predicated region
        $region49: #{multi_head_attention.1} parent=43 // pred_check
          %p300 = pneg %p94
        $region50: #{multi_head_attention.1} parent=43 // pred_check_branch
          %302 = sbr.rel (%p300) target = $region52
        $region51: #{multi_head_attention.1} parent=43 // pred_region
          %303 = dma.done [#allocation6], 1024
        $region52: #{multi_head_attention.1} parent=43 // pred_fallthru
          _
        // Predicated region
        $region53: #{multi_head_attention.1} parent=43 // pred_check
          %p304 = pneg %p136
        $region54: #{multi_head_attention.1} parent=43 // pred_check_branch
          %306 = sbr.rel (%p304) target = $region56
        $region55: #{multi_head_attention.1} parent=43 // pred_region
          %307 = dma.done [#allocation6], 1024
        $region56: #{multi_head_attention.1} parent=43 // pred_fallthru
          _
        %s308 = sand.u32 %s34, 1
        %s309 = scalar_lea.sflag [#allocation3], %s308
        %s310 = sand.u32 %s34, 1
        %s311 = smul.addr %s310, 8
        %s312 = scalar_lea.vmem [#allocation2], %s311
        %p313 = pneg %p47
        %p314 = pneg %p44
        %p315 = scmp.lt.s32.totalorder %s26, 1
        %s316 = scalar_select %p315, %s26, 1
        %s317 = scalar_lea.vmem %s1, %s316
        %p318 = pneg %p73
        %p319 = pneg %p70
        %p320 = pneg %p94
        %p321 = pneg %p91
        %p322 = pneg %p115
        %p323 = pneg %p112
        %p324 = pneg %p136
        %p325 = pneg %p133
        %p326 = pneg %p157
        %p327 = pneg %p154
        %p328 = pneg %p183
        %p329 = pneg %p180
        %s330 = sand.u32 %s170, 1
        %s331 = scalar_lea.sflag [#allocation4], %s330
        %s332 = sand.u32 %s170, 1
        %s333 = smul.addr %s332, 8
        %s334 = scalar_lea.vmem [#allocation8], %s333
        %p335 = pneg %p209
        %p336 = pneg %p206
        %p337 = scmp.lt.s32.totalorder %s26, 1
        %s338 = scalar_select %p337, %s26, 1
        %s339 = smul.addr %s338, 2
        %s340 = smul.addr %s339, 8
        %s341 = scalar_lea.vmem %s7, %s340
        %p342 = scmp.lt.s32.totalorder %s26, 1
        %s343 = scalar_select %p342, %s26, 1
        %s344 = scalar_lea.vmem %s1, %s343
        %p345 = scmp.lt.s32.totalorder %s26, 1
        %s346 = scalar_select %p345, %s26, 1
        %s347 = smul.addr %s346, 2
        %s348 = smul.addr %s347, 8
        %s349 = scalar_lea.vmem %s7, %s348
        %v350 = vld [vmem:[%s295] sm:$0xff]
        %v351 = vld [vmem:[%s344] sm:$0x1]
        %v352 = vld [vmem:[#allocation5] sm:$0xff]
        %v353 = vld [vmem:[#allocation5 + $0x8] sm:$0xff]
        %v354 = vld [vmem:[#allocation5 + $0x10] sm:$0xff]
        %v355 = vld [vmem:[#allocation5 + $0x18] sm:$0xff]
        %v356 = vld [vmem:[%s3] sm:$0x1]
        %v358 = vlaneseq
        %v359 = vshrl.u32 %v358, 7
        %v360 = vsub.s32 0, %v359
        %v361 = vrot.slane %v356, %v360
        %vm363 = vcmask 261120
        %v365 = vsel %vm363, %v350, 0
        %367 = vmatprep.subr.mxu0 0.0
        %368 = vmatpush1.msra.mxu0 0.0
        %369 = vmatprep.subr.mxu0 0.0
        %370 = vmatpush1.msra.mxu0 0.0
        %371 = vmatprep.subr.mxu0 0.0
        %372 = vmatpush1.msra.mxu0 0.0
        %373 = vmatprep.subr.mxu0 0.0
        %374 = vmatpush1.msra.mxu0 0.0
        %375 = vmatprep.subr.mxu0 0.0
        %376 = vmatpush1.msra.mxu0 0.0
        %377 = vmatprep.subr.mxu0 0.0
        %378 = vmatpush1.msra.mxu0 0.0
        %379 = vmatprep.subr.mxu0 0.0
        %380 = vmatpush1.msra.mxu0 0.0
        %381 = vmatprep.subr.mxu0 0.0
        %382 = vmatpush1.msra.mxu0 0.0
        %383 = vmatprep.subr.mxu0 0.0
        %384 = vmatpush1.msra.mxu0 0.0
        %385 = vmatprep.subr.mxu0 0.0
        %386 = vmatpush1.msra.mxu0 0.0
        %387 = vmatprep.subr.mxu0 0.0
        %388 = vmatpush1.msra.mxu0 0.0
        %389 = vmatprep.subr.mxu0 0.0
        %390 = vmatpush1.msra.mxu0 0.0
        %391 = vmatprep.subr.mxu0 0.0
        %392 = vmatpush1.msra.mxu0 %v355
        %393 = vmatprep.subr.mxu0 0.0
        %394 = vmatpush1.msra.mxu0 %v354
        %395 = vmatprep.subr.mxu0 0.0
        %396 = vmatpush1.msra.mxu0 %v353
        %397 = vmatprep.subr.mxu0 0.0
        %398 = vmatpush1.msra.mxu0 %v352
        %399 = vmatprep.subr.mxu0 0.0
        %400 = vmatpush2.msra.mxu0 0.0
        %401 = vmatprep.subr.mxu0 0.0
        %402 = vmatpush2.msra.mxu0 0.0
        %403 = vmatprep.subr.mxu0 0.0
        %404 = vmatpush2.msra.mxu0 0.0
        %405 = vmatprep.subr.mxu0 0.0
        %406 = vmatpush2.msra.mxu0 0.0
        %407 = vmatprep.subr.mxu0 0.0
        %408 = vmatpush2.msra.mxu0 0.0
        %409 = vmatprep.subr.mxu0 0.0
        %410 = vmatpush2.msra.mxu0 0.0
        %411 = vmatprep.subr.mxu0 0.0
        %412 = vmatpush2.msra.mxu0 0.0
        %413 = vmatprep.subr.mxu0 0.0
        %414 = vmatpush2.msra.mxu0 0.0
        %415 = vmatprep.subr.mxu0 0.0
        %416 = vmatpush2.msra.mxu0 0.0
        %417 = vmatprep.subr.mxu0 0.0
        %418 = vmatpush2.msra.mxu0 0.0
        %419 = vmatprep.subr.mxu0 0.0
        %420 = vmatpush2.msra.mxu0 0.0
        %421 = vmatprep.subr.mxu0 0.0
        %422 = vmatpush2.msra.mxu0 0.0
        %423 = vmatprep.subr.mxu0 0.0
        %424 = vmatpush2.msra.mxu0 0.0
        %425 = vmatprep.subr.mxu0 0.0
        %426 = vmatpush2.msra.mxu0 0.0
        %427 = vmatprep.subr.mxu0 0.0
        %428 = vmatpush2.msra.mxu0 0.0
        %429 = vmatprep.subr.mxu0 0.0
        %430 = vmatpush2.msra.mxu0 0.0
        %431 = vmatprep.mubr.f32.mxu0 0.0
        %432 = vmatmul.mubr.f32.gmra.mxu0 %v365
        %v433 = vpop.f32.mrf.mxu0
        %v434 = vadd.f32 %v361, %v433
        %v435 = vpop.f32.mrf.mxu0
        %436 = vdwg.mxu0
        %v437 = vmul.f32 %v434, 0.17677669
        %439 = vrot.lane.b32.xlu0 %v434, 96
        %v440 = vpop.permute.xlu0 %439
        %v442 = vsel %vm363, %v437, 0
        %v444 = vsel %vm363, %v440, 0
        %446 = vmatprep.subr.mxu0 0.0
        %447 = vmatpush1.xpose.msra.mxu0 0.0
        %448 = vmatprep.subr.mxu0 0.0
        %449 = vmatpush1.xpose.msra.mxu0 0.0
        %450 = vmatprep.subr.mxu0 0.0
        %451 = vmatpush1.xpose.msra.mxu0 0.0
        %452 = vmatprep.subr.mxu0 0.0
        %453 = vmatpush1.xpose.msra.mxu0 0.0
        %454 = vmatprep.subr.mxu0 0.0
        %455 = vmatpush1.xpose.msra.mxu0 0.0
        %456 = vmatprep.subr.mxu0 0.0
        %457 = vmatpush1.xpose.msra.mxu0 0.0
        %458 = vmatprep.subr.mxu0 0.0
        %459 = vmatpush1.xpose.msra.mxu0 0.0
        %460 = vmatprep.subr.mxu0 0.0
        %461 = vmatpush1.xpose.msra.mxu0 0.0
        %462 = vmatprep.subr.mxu0 0.0
        %463 = vmatpush1.xpose.msra.mxu0 0.0
        %464 = vmatprep.subr.mxu0 0.0
        %465 = vmatpush1.xpose.msra.mxu0 0.0
        %466 = vmatprep.subr.mxu0 0.0
        %467 = vmatpush1.xpose.msra.mxu0 0.0
        %468 = vmatprep.subr.mxu0 0.0
        %469 = vmatpush1.xpose.msra.mxu0 0.0
        %470 = vmatprep.subr.mxu0 0.0
        %471 = vmatpush1.xpose.msra.mxu0 0.0
        %472 = vmatprep.subr.mxu0 0.0
        %473 = vmatpush1.xpose.msra.mxu0 0.0
        %474 = vmatprep.subr.mxu0 0.0
        %475 = vmatpush1.xpose.msra.mxu0 0.0
        %476 = vmatprep.subr.mxu0 0.0
        %477 = vmatpush1.xpose.msra.mxu0 %v444
        %478 = vmatprep.subr.mxu0 0.0
        %479 = vmatpush2.xpose.msra.mxu0 0.0
        %480 = vmatprep.subr.mxu0 0.0
        %481 = vmatpush2.xpose.msra.mxu0 0.0
        %482 = vmatprep.subr.mxu0 0.0
        %483 = vmatpush2.xpose.msra.mxu0 0.0
        %484 = vmatprep.subr.mxu0 0.0
        %485 = vmatpush2.xpose.msra.mxu0 0.0
        %486 = vmatprep.subr.mxu0 0.0
        %487 = vmatpush2.xpose.msra.mxu0 0.0
        %488 = vmatprep.subr.mxu0 0.0
        %489 = vmatpush2.xpose.msra.mxu0 0.0
        %490 = vmatprep.subr.mxu0 0.0
        %491 = vmatpush2.xpose.msra.mxu0 0.0
        %492 = vmatprep.subr.mxu0 0.0
        %493 = vmatpush2.xpose.msra.mxu0 0.0
        %494 = vmatprep.subr.mxu0 0.0
        %495 = vmatpush2.xpose.msra.mxu0 0.0
        %496 = vmatprep.subr.mxu0 0.0
        %497 = vmatpush2.xpose.msra.mxu0 0.0
        %498 = vmatprep.subr.mxu0 0.0
        %499 = vmatpush2.xpose.msra.mxu0 0.0
        %500 = vmatprep.subr.mxu0 0.0
        %501 = vmatpush2.xpose.msra.mxu0 0.0
        %502 = vmatprep.subr.mxu0 0.0
        %503 = vmatpush2.xpose.msra.mxu0 0.0
        %504 = vmatprep.subr.mxu0 0.0
        %505 = vmatpush2.xpose.msra.mxu0 0.0
        %506 = vmatprep.subr.mxu0 0.0
        %507 = vmatpush2.xpose.msra.mxu0 0.0
        %508 = vmatprep.subr.mxu0 0.0
        %509 = vmatpush2.xpose.msra.mxu0 0.0
        %510 = vmatprep.mubr.f32.mxu0 0.0
        %511 = vmatmul.mubr.f32.gmra.mxu0 %v442
        %v512 = vpop.f32.mrf.mxu0
        %v513 = vadd.f32 0.0, %v512
        %v514 = vpop.f32.mrf.mxu0
        %515 = vdwg.mxu0
        %vm516 = vcmp.eq.f32.partialorder %v351, 0.0
        %v517 = vsel %vm516, 1, 0
        %v518 = vlaneseq
        %v519 = vshrl.u32 %v518, 7
        %v520 = vsub.s32 0, %v519
        %v521 = vrot.slane %v517, %v520
        %vm522 = vcmp.eq.s32.totalorder %v521, 1
        %v523 = vsel %vm522, -1e+30, %v513
        %vm524 = vcmask 64512
        %v525 = vsel %vm524, %v523, -inf
        %526 = vmax.xlane.f32.xlu0 %v525
        %v527 = vpop.xlane.xlu0 %526
        %v528 = vsub.f32 %v523, %v527
        %v529 = vmul.f32 %v528, 1.442695
        %v530 = vpow.pop %v529
        %v531 = vsel %vm524, %v530, 0.0
        %532 = vadd.xlane.f32.xlu0 %v531
        %v533 = vpop.xlane.xlu0 %532
        %v534 = vrcp.pop %v533
        %v535 = vmul.f32 %v530, %v534
        %536 = vst.msk [vmem:[%s349] sm:$0xff] %vm524, %v535
        %537 = vrot.lane.b32.xlu0 %v434, 64
        %v538 = vpop.permute.xlu0 %537
        %v541 = vsel %vm524, %v535, 0
        %543 = vmatprep.subr.mxu0 0.0
        %544 = vmatpush1.msra.mxu0 0.0
        %545 = vmatprep.subr.mxu0 0.0
        %546 = vmatpush1.msra.mxu0 0.0
        %547 = vmatprep.subr.mxu0 0.0
        %548 = vmatpush1.msra.mxu0 0.0
        %549 = vmatprep.subr.mxu0 0.0
        %550 = vmatpush1.msra.mxu0 0.0
        %551 = vmatprep.subr.mxu0 0.0
        %552 = vmatpush1.msra.mxu0 0.0
        %553 = vmatprep.subr.mxu0 0.0
        %554 = vmatpush1.msra.mxu0 0.0
        %555 = vmatprep.subr.mxu0 0.0
        %556 = vmatpush1.msra.mxu0 0.0
        %557 = vmatprep.subr.mxu0 0.0
        %558 = vmatpush1.msra.mxu0 0.0
        %559 = vmatprep.subr.mxu0 0.0
        %560 = vmatpush1.msra.mxu0 0.0
        %561 = vmatprep.subr.mxu0 0.0
        %562 = vmatpush1.msra.mxu0 0.0
        %563 = vmatprep.subr.mxu0 0.0
        %564 = vmatpush1.msra.mxu0 0.0
        %565 = vmatprep.subr.mxu0 0.0
        %566 = vmatpush1.msra.mxu0 0.0
        %567 = vmatprep.subr.mxu0 0.0
        %568 = vmatpush1.msra.mxu0 0.0
        %569 = vmatprep.subr.mxu0 0.0
        %570 = vmatpush1.msra.mxu0 0.0
        %571 = vmatprep.subr.mxu0 0.0
        %572 = vmatpush1.msra.mxu0 0.0
        %573 = vmatprep.subr.mxu0 0.0
        %574 = vmatpush1.msra.mxu0 %v538
        %575 = vmatprep.subr.mxu0 0.0
        %576 = vmatpush2.msra.mxu0 0.0
        %577 = vmatprep.subr.mxu0 0.0
        %578 = vmatpush2.msra.mxu0 0.0
        %579 = vmatprep.subr.mxu0 0.0
        %580 = vmatpush2.msra.mxu0 0.0
        %581 = vmatprep.subr.mxu0 0.0
        %582 = vmatpush2.msra.mxu0 0.0
        %583 = vmatprep.subr.mxu0 0.0
        %584 = vmatpush2.msra.mxu0 0.0
        %585 = vmatprep.subr.mxu0 0.0
        %586 = vmatpush2.msra.mxu0 0.0
        %587 = vmatprep.subr.mxu0 0.0
        %588 = vmatpush2.msra.mxu0 0.0
        %589 = vmatprep.subr.mxu0 0.0
        %590 = vmatpush2.msra.mxu0 0.0
        %591 = vmatprep.subr.mxu0 0.0
        %592 = vmatpush2.msra.mxu0 0.0
        %593 = vmatprep.subr.mxu0 0.0
        %594 = vmatpush2.msra.mxu0 0.0
        %595 = vmatprep.subr.mxu0 0.0
        %596 = vmatpush2.msra.mxu0 0.0
        %597 = vmatprep.subr.mxu0 0.0
        %598 = vmatpush2.msra.mxu0 0.0
        %599 = vmatprep.subr.mxu0 0.0
        %600 = vmatpush2.msra.mxu0 0.0
        %601 = vmatprep.subr.mxu0 0.0
        %602 = vmatpush2.msra.mxu0 0.0
        %603 = vmatprep.subr.mxu0 0.0
        %604 = vmatpush2.msra.mxu0 0.0
        %605 = vmatprep.subr.mxu0 0.0
        %606 = vmatpush2.msra.mxu0 0.0
        %607 = vmatprep.mubr.f32.mxu0 0.0
        %608 = vmatmul.mubr.f32.gmra.mxu0 %v541
        %v609 = vpop.f32.mrf.mxu0
        %v610 = vadd.f32 0.0, %v609
        %v611 = vpop.f32.mrf.mxu0
        %612 = vdwg.mxu0
        %v613 = vld [vmem:[#allocation7] sm:$0xff]
        %v614 = vld [vmem:[#allocation7 + $0x8] sm:$0xff]
        %v615 = vld [vmem:[#allocation7 + $0x10] sm:$0xff]
        %v616 = vld [vmem:[#allocation7 + $0x18] sm:$0xff]
        %s617 = scalar_lea.vmem [#allocation5], 32
        %v618 = vld [vmem:[%s617] sm:$0xff]
        %v619 = vld [vmem:[%s617 + $0x8] sm:$0xff]
        %v620 = vld [vmem:[%s617 + $0x10] sm:$0xff]
        %v621 = vld [vmem:[%s617 + $0x18] sm:$0xff]
        %s622 = scalar_lea.vmem %s3, 1
        %v623 = vld [vmem:[%s622] sm:$0x1]
        %v625 = vlaneseq
        %v626 = vshrl.u32 %v625, 7
        %v627 = vsub.s32 0, %v626
        %v628 = vrot.slane %v623, %v627
        %630 = vmatprep.subr.mxu0 0.0
        %631 = vmatpush1.msra.mxu0 0.0
        %632 = vmatprep.subr.mxu0 0.0
        %633 = vmatpush1.msra.mxu0 0.0
        %634 = vmatprep.subr.mxu0 0.0
        %635 = vmatpush1.msra.mxu0 0.0
        %636 = vmatprep.subr.mxu0 0.0
        %637 = vmatpush1.msra.mxu0 0.0
        %638 = vmatprep.subr.mxu0 0.0
        %639 = vmatpush1.msra.mxu0 0.0
        %640 = vmatprep.subr.mxu0 0.0
        %641 = vmatpush1.msra.mxu0 0.0
        %642 = vmatprep.subr.mxu0 0.0
        %643 = vmatpush1.msra.mxu0 0.0
        %644 = vmatprep.subr.mxu0 0.0
        %645 = vmatpush1.msra.mxu0 0.0
        %646 = vmatprep.subr.mxu0 0.0
        %647 = vmatpush1.msra.mxu0 0.0
        %648 = vmatprep.subr.mxu0 0.0
        %649 = vmatpush1.msra.mxu0 0.0
        %650 = vmatprep.subr.mxu0 0.0
        %651 = vmatpush1.msra.mxu0 0.0
        %652 = vmatprep.subr.mxu0 0.0
        %653 = vmatpush1.msra.mxu0 0.0
        %654 = vmatprep.subr.mxu0 0.0
        %655 = vmatpush1.msra.mxu0 %v621
        %656 = vmatprep.subr.mxu0 0.0
        %657 = vmatpush1.msra.mxu0 %v620
        %658 = vmatprep.subr.mxu0 0.0
        %659 = vmatpush1.msra.mxu0 %v619
        %660 = vmatprep.subr.mxu0 0.0
        %661 = vmatpush1.msra.mxu0 %v618
        %662 = vmatprep.subr.mxu0 0.0
        %663 = vmatpush2.msra.mxu0 0.0
        %664 = vmatprep.subr.mxu0 0.0
        %665 = vmatpush2.msra.mxu0 0.0
        %666 = vmatprep.subr.mxu0 0.0
        %667 = vmatpush2.msra.mxu0 0.0
        %668 = vmatprep.subr.mxu0 0.0
        %669 = vmatpush2.msra.mxu0 0.0
        %670 = vmatprep.subr.mxu0 0.0
        %671 = vmatpush2.msra.mxu0 0.0
        %672 = vmatprep.subr.mxu0 0.0
        %673 = vmatpush2.msra.mxu0 0.0
        %674 = vmatprep.subr.mxu0 0.0
        %675 = vmatpush2.msra.mxu0 0.0
        %676 = vmatprep.subr.mxu0 0.0
        %677 = vmatpush2.msra.mxu0 0.0
        %678 = vmatprep.subr.mxu0 0.0
        %679 = vmatpush2.msra.mxu0 0.0
        %680 = vmatprep.subr.mxu0 0.0
        %681 = vmatpush2.msra.mxu0 0.0
        %682 = vmatprep.subr.mxu0 0.0
        %683 = vmatpush2.msra.mxu0 0.0
        %684 = vmatprep.subr.mxu0 0.0
        %685 = vmatpush2.msra.mxu0 0.0
        %686 = vmatprep.subr.mxu0 0.0
        %687 = vmatpush2.msra.mxu0 0.0
        %688 = vmatprep.subr.mxu0 0.0
        %689 = vmatpush2.msra.mxu0 0.0
        %690 = vmatprep.subr.mxu0 0.0
        %691 = vmatpush2.msra.mxu0 0.0
        %692 = vmatprep.subr.mxu0 0.0
        %693 = vmatpush2.msra.mxu0 0.0
        %694 = vmatprep.mubr.f32.mxu0 0.0
        %695 = vmatmul.mubr.f32.gmra.mxu0 %v365
        %v696 = vpop.f32.mrf.mxu0
        %v697 = vadd.f32 %v628, %v696
        %v698 = vpop.f32.mrf.mxu0
        %699 = vdwg.mxu0
        %v700 = vmul.f32 %v697, 0.17677669
        %702 = vrot.lane.b32.xlu0 %v697, 96
        %v703 = vpop.permute.xlu0 %702
        %v705 = vsel %vm363, %v700, 0
        %v707 = vsel %vm363, %v703, 0
        %709 = vmatprep.subr.mxu0 0.0
        %710 = vmatpush1.xpose.msra.mxu0 0.0
        %711 = vmatprep.subr.mxu0 0.0
        %712 = vmatpush1.xpose.msra.mxu0 0.0
        %713 = vmatprep.subr.mxu0 0.0
        %714 = vmatpush1.xpose.msra.mxu0 0.0
        %715 = vmatprep.subr.mxu0 0.0
        %716 = vmatpush1.xpose.msra.mxu0 0.0
        %717 = vmatprep.subr.mxu0 0.0
        %718 = vmatpush1.xpose.msra.mxu0 0.0
        %719 = vmatprep.subr.mxu0 0.0
        %720 = vmatpush1.xpose.msra.mxu0 0.0
        %721 = vmatprep.subr.mxu0 0.0
        %722 = vmatpush1.xpose.msra.mxu0 0.0
        %723 = vmatprep.subr.mxu0 0.0
        %724 = vmatpush1.xpose.msra.mxu0 0.0
        %725 = vmatprep.subr.mxu0 0.0
        %726 = vmatpush1.xpose.msra.mxu0 0.0
        %727 = vmatprep.subr.mxu0 0.0
        %728 = vmatpush1.xpose.msra.mxu0 0.0
        %729 = vmatprep.subr.mxu0 0.0
        %730 = vmatpush1.xpose.msra.mxu0 0.0
        %731 = vmatprep.subr.mxu0 0.0
        %732 = vmatpush1.xpose.msra.mxu0 0.0
        %733 = vmatprep.subr.mxu0 0.0
        %734 = vmatpush1.xpose.msra.mxu0 0.0
        %735 = vmatprep.subr.mxu0 0.0
        %736 = vmatpush1.xpose.msra.mxu0 0.0
        %737 = vmatprep.subr.mxu0 0.0
        %738 = vmatpush1.xpose.msra.mxu0 0.0
        %739 = vmatprep.subr.mxu0 0.0
        %740 = vmatpush1.xpose.msra.mxu0 %v707
        %741 = vmatprep.subr.mxu0 0.0
        %742 = vmatpush2.xpose.msra.mxu0 0.0
        %743 = vmatprep.subr.mxu0 0.0
        %744 = vmatpush2.xpose.msra.mxu0 0.0
        %745 = vmatprep.subr.mxu0 0.0
        %746 = vmatpush2.xpose.msra.mxu0 0.0
        %747 = vmatprep.subr.mxu0 0.0
        %748 = vmatpush2.xpose.msra.mxu0 0.0
        %749 = vmatprep.subr.mxu0 0.0
        %750 = vmatpush2.xpose.msra.mxu0 0.0
        %751 = vmatprep.subr.mxu0 0.0
        %752 = vmatpush2.xpose.msra.mxu0 0.0
        %753 = vmatprep.subr.mxu0 0.0
        %754 = vmatpush2.xpose.msra.mxu0 0.0
        %755 = vmatprep.subr.mxu0 0.0
        %756 = vmatpush2.xpose.msra.mxu0 0.0
        %757 = vmatprep.subr.mxu0 0.0
        %758 = vmatpush2.xpose.msra.mxu0 0.0
        %759 = vmatprep.subr.mxu0 0.0
        %760 = vmatpush2.xpose.msra.mxu0 0.0
        %761 = vmatprep.subr.mxu0 0.0
        %762 = vmatpush2.xpose.msra.mxu0 0.0
        %763 = vmatprep.subr.mxu0 0.0
        %764 = vmatpush2.xpose.msra.mxu0 0.0
        %765 = vmatprep.subr.mxu0 0.0
        %766 = vmatpush2.xpose.msra.mxu0 0.0
        %767 = vmatprep.subr.mxu0 0.0
        %768 = vmatpush2.xpose.msra.mxu0 0.0
        %769 = vmatprep.subr.mxu0 0.0
        %770 = vmatpush2.xpose.msra.mxu0 0.0
        %771 = vmatprep.subr.mxu0 0.0
        %772 = vmatpush2.xpose.msra.mxu0 0.0
        %773 = vmatprep.mubr.f32.mxu0 0.0
        %774 = vmatmul.mubr.f32.gmra.mxu0 %v705
        %v775 = vpop.f32.mrf.mxu0
        %v776 = vadd.f32 0.0, %v775
        %v777 = vpop.f32.mrf.mxu0
        %778 = vdwg.mxu0
        %v779 = vsel %vm522, -1e+30, %v776
        %v780 = vsel %vm524, %v779, -inf
        %781 = vmax.xlane.f32.xlu0 %v780
        %v782 = vpop.xlane.xlu0 %781
        %v783 = vsub.f32 %v779, %v782
        %v784 = vmul.f32 %v783, 1.442695
        %v785 = vpow.pop %v784
        %v786 = vsel %vm524, %v785, 0.0
        %787 = vadd.xlane.f32.xlu0 %v786
        %v788 = vpop.xlane.xlu0 %787
        %v789 = vrcp.pop %v788
        %v790 = vmul.f32 %v785, %v789
        %s791 = scalar_lea.vmem %s349, 8
        %792 = vst.msk [vmem:[%s791] sm:$0xff] %vm524, %v790
        %793 = vrot.lane.b32.xlu0 %v697, 64
        %v794 = vpop.permute.xlu0 %793
        %v797 = vsel %vm524, %v790, 0
        %799 = vmatprep.subr.mxu0 0.0
        %800 = vmatpush1.msra.mxu0 0.0
        %801 = vmatprep.subr.mxu0 0.0
        %802 = vmatpush1.msra.mxu0 0.0
        %803 = vmatprep.subr.mxu0 0.0
        %804 = vmatpush1.msra.mxu0 0.0
        %805 = vmatprep.subr.mxu0 0.0
        %806 = vmatpush1.msra.mxu0 0.0
        %807 = vmatprep.subr.mxu0 0.0
        %808 = vmatpush1.msra.mxu0 0.0
        %809 = vmatprep.subr.mxu0 0.0
        %810 = vmatpush1.msra.mxu0 0.0
        %811 = vmatprep.subr.mxu0 0.0
        %812 = vmatpush1.msra.mxu0 0.0
        %813 = vmatprep.subr.mxu0 0.0
        %814 = vmatpush1.msra.mxu0 0.0
        %815 = vmatprep.subr.mxu0 0.0
        %816 = vmatpush1.msra.mxu0 0.0
        %817 = vmatprep.subr.mxu0 0.0
        %818 = vmatpush1.msra.mxu0 0.0
        %819 = vmatprep.subr.mxu0 0.0
        %820 = vmatpush1.msra.mxu0 0.0
        %821 = vmatprep.subr.mxu0 0.0
        %822 = vmatpush1.msra.mxu0 0.0
        %823 = vmatprep.subr.mxu0 0.0
        %824 = vmatpush1.msra.mxu0 0.0
        %825 = vmatprep.subr.mxu0 0.0
        %826 = vmatpush1.msra.mxu0 0.0
        %827 = vmatprep.subr.mxu0 0.0
        %828 = vmatpush1.msra.mxu0 0.0
        %829 = vmatprep.subr.mxu0 0.0
        %830 = vmatpush1.msra.mxu0 %v794
        %831 = vmatprep.subr.mxu0 0.0
        %832 = vmatpush2.msra.mxu0 0.0
        %833 = vmatprep.subr.mxu0 0.0
        %834 = vmatpush2.msra.mxu0 0.0
        %835 = vmatprep.subr.mxu0 0.0
        %836 = vmatpush2.msra.mxu0 0.0
        %837 = vmatprep.subr.mxu0 0.0
        %838 = vmatpush2.msra.mxu0 0.0
        %839 = vmatprep.subr.mxu0 0.0
        %840 = vmatpush2.msra.mxu0 0.0
        %841 = vmatprep.subr.mxu0 0.0
        %842 = vmatpush2.msra.mxu0 0.0
        %843 = vmatprep.subr.mxu0 0.0
        %844 = vmatpush2.msra.mxu0 0.0
        %845 = vmatprep.subr.mxu0 0.0
        %846 = vmatpush2.msra.mxu0 0.0
        %847 = vmatprep.subr.mxu0 0.0
        %848 = vmatpush2.msra.mxu0 0.0
        %849 = vmatprep.subr.mxu0 0.0
        %850 = vmatpush2.msra.mxu0 0.0
        %851 = vmatprep.subr.mxu0 0.0
        %852 = vmatpush2.msra.mxu0 0.0
        %853 = vmatprep.subr.mxu0 0.0
        %854 = vmatpush2.msra.mxu0 0.0
        %855 = vmatprep.subr.mxu0 0.0
        %856 = vmatpush2.msra.mxu0 0.0
        %857 = vmatprep.subr.mxu0 0.0
        %858 = vmatpush2.msra.mxu0 0.0
        %859 = vmatprep.subr.mxu0 0.0
        %860 = vmatpush2.msra.mxu0 0.0
        %861 = vmatprep.subr.mxu0 0.0
        %862 = vmatpush2.msra.mxu0 0.0
        %863 = vmatprep.mubr.f32.mxu0 0.0
        %864 = vmatmul.mubr.f32.gmra.mxu0 %v797
        %v865 = vpop.f32.mrf.mxu0
        %v866 = vadd.f32 0.0, %v865
        %v867 = vpop.f32.mrf.mxu0
        %868 = vdwg.mxu0
        %s869 = scalar_lea.vmem [#allocation7], 32
        %v870 = vld [vmem:[%s869] sm:$0xff]
        %v871 = vld [vmem:[%s869 + $0x8] sm:$0xff]
        %v872 = vld [vmem:[%s869 + $0x10] sm:$0xff]
        %v873 = vld [vmem:[%s869 + $0x18] sm:$0xff]
        %v875 = vsel %vm363, %v866, 0
        %877 = vmatprep.subr.mxu0 0.0
        %878 = vmatpush1.msra.mxu0 0.0
        %879 = vmatprep.subr.mxu0 0.0
        %880 = vmatpush1.msra.mxu0 0.0
        %881 = vmatprep.subr.mxu0 0.0
        %882 = vmatpush1.msra.mxu0 0.0
        %883 = vmatprep.subr.mxu0 0.0
        %884 = vmatpush1.msra.mxu0 0.0
        %885 = vmatprep.subr.mxu0 0.0
        %886 = vmatpush1.msra.mxu0 0.0
        %887 = vmatprep.subr.mxu0 0.0
        %888 = vmatpush1.msra.mxu0 0.0
        %889 = vmatprep.subr.mxu0 0.0
        %890 = vmatpush1.msra.mxu0 0.0
        %891 = vmatprep.subr.mxu0 0.0
        %892 = vmatpush1.msra.mxu0 0.0
        %893 = vmatprep.subr.mxu0 0.0
        %894 = vmatpush1.msra.mxu0 0.0
        %895 = vmatprep.subr.mxu0 0.0
        %896 = vmatpush1.msra.mxu0 0.0
        %897 = vmatprep.subr.mxu0 0.0
        %898 = vmatpush1.msra.mxu0 0.0
        %899 = vmatprep.subr.mxu0 0.0
        %900 = vmatpush1.msra.mxu0 0.0
        %901 = vmatprep.subr.mxu0 0.0
        %902 = vmatpush1.msra.mxu0 %v873
        %903 = vmatprep.subr.mxu0 0.0
        %904 = vmatpush1.msra.mxu0 %v872
        %905 = vmatprep.subr.mxu0 0.0
        %906 = vmatpush1.msra.mxu0 %v871
        %907 = vmatprep.subr.mxu0 0.0
        %908 = vmatpush1.msra.mxu0 %v870
        %909 = vmatprep.subr.mxu0 0.0
        %910 = vmatpush2.msra.mxu0 0.0
        %911 = vmatprep.subr.mxu0 0.0
        %912 = vmatpush2.msra.mxu0 0.0
        %913 = vmatprep.subr.mxu0 0.0
        %914 = vmatpush2.msra.mxu0 0.0
        %915 = vmatprep.subr.mxu0 0.0
        %916 = vmatpush2.msra.mxu0 0.0
        %917 = vmatprep.subr.mxu0 0.0
        %918 = vmatpush2.msra.mxu0 0.0
        %919 = vmatprep.subr.mxu0 0.0
        %920 = vmatpush2.msra.mxu0 0.0
        %921 = vmatprep.subr.mxu0 0.0
        %922 = vmatpush2.msra.mxu0 0.0
        %923 = vmatprep.subr.mxu0 0.0
        %924 = vmatpush2.msra.mxu0 0.0
        %925 = vmatprep.subr.mxu0 0.0
        %926 = vmatpush2.msra.mxu0 0.0
        %927 = vmatprep.subr.mxu0 0.0
        %928 = vmatpush2.msra.mxu0 0.0
        %929 = vmatprep.subr.mxu0 0.0
        %930 = vmatpush2.msra.mxu0 0.0
        %931 = vmatprep.subr.mxu0 0.0
        %932 = vmatpush2.msra.mxu0 0.0
        %933 = vmatprep.subr.mxu0 0.0
        %934 = vmatpush2.msra.mxu0 0.0
        %935 = vmatprep.subr.mxu0 0.0
        %936 = vmatpush2.msra.mxu0 0.0
        %937 = vmatprep.subr.mxu0 0.0
        %938 = vmatpush2.msra.mxu0 0.0
        %939 = vmatprep.subr.mxu0 0.0
        %940 = vmatpush2.msra.mxu0 0.0
        %941 = vmatprep.mubr.f32.mxu0 0.0
        %942 = vmatmul.mubr.f32.gmra.mxu0 %v875
        %v943 = vpop.f32.mrf.mxu0
        %v944 = vadd.f32 0.0, %v943
        %v945 = vpop.f32.mrf.mxu0
        %946 = vdwg.mxu0
        %v948 = vsel %vm363, %v610, 0
        %950 = vmatprep.subr.mxu0 0.0
        %951 = vmatpush1.msra.mxu0 0.0
        %952 = vmatprep.subr.mxu0 0.0
        %953 = vmatpush1.msra.mxu0 0.0
        %954 = vmatprep.subr.mxu0 0.0
        %955 = vmatpush1.msra.mxu0 0.0
        %956 = vmatprep.subr.mxu0 0.0
        %957 = vmatpush1.msra.mxu0 0.0
        %958 = vmatprep.subr.mxu0 0.0
        %959 = vmatpush1.msra.mxu0 0.0
        %960 = vmatprep.subr.mxu0 0.0
        %961 = vmatpush1.msra.mxu0 0.0
        %962 = vmatprep.subr.mxu0 0.0
        %963 = vmatpush1.msra.mxu0 0.0
        %964 = vmatprep.subr.mxu0 0.0
        %965 = vmatpush1.msra.mxu0 0.0
        %966 = vmatprep.subr.mxu0 0.0
        %967 = vmatpush1.msra.mxu0 0.0
        %968 = vmatprep.subr.mxu0 0.0
        %969 = vmatpush1.msra.mxu0 0.0
        %970 = vmatprep.subr.mxu0 0.0
        %971 = vmatpush1.msra.mxu0 0.0
        %972 = vmatprep.subr.mxu0 0.0
        %973 = vmatpush1.msra.mxu0 0.0
        %974 = vmatprep.subr.mxu0 0.0
        %975 = vmatpush1.msra.mxu0 %v616
        %976 = vmatprep.subr.mxu0 0.0
        %977 = vmatpush1.msra.mxu0 %v615
        %978 = vmatprep.subr.mxu0 0.0
        %979 = vmatpush1.msra.mxu0 %v614
        %980 = vmatprep.subr.mxu0 0.0
        %981 = vmatpush1.msra.mxu0 %v613
        %982 = vmatprep.subr.mxu0 0.0
        %983 = vmatpush2.msra.mxu0 0.0
        %984 = vmatprep.subr.mxu0 0.0
        %985 = vmatpush2.msra.mxu0 0.0
        %986 = vmatprep.subr.mxu0 0.0
        %987 = vmatpush2.msra.mxu0 0.0
        %988 = vmatprep.subr.mxu0 0.0
        %989 = vmatpush2.msra.mxu0 0.0
        %990 = vmatprep.subr.mxu0 0.0
        %991 = vmatpush2.msra.mxu0 0.0
        %992 = vmatprep.subr.mxu0 0.0
        %993 = vmatpush2.msra.mxu0 0.0
        %994 = vmatprep.subr.mxu0 0.0
        %995 = vmatpush2.msra.mxu0 0.0
        %996 = vmatprep.subr.mxu0 0.0
        %997 = vmatpush2.msra.mxu0 0.0
        %998 = vmatprep.subr.mxu0 0.0
        %999 = vmatpush2.msra.mxu0 0.0
        %1000 = vmatprep.subr.mxu0 0.0
        %1001 = vmatpush2.msra.mxu0 0.0
        %1002 = vmatprep.subr.mxu0 0.0
        %1003 = vmatpush2.msra.mxu0 0.0
        %1004 = vmatprep.subr.mxu0 0.0
        %1005 = vmatpush2.msra.mxu0 0.0
        %1006 = vmatprep.subr.mxu0 0.0
        %1007 = vmatpush2.msra.mxu0 0.0
        %1008 = vmatprep.subr.mxu0 0.0
        %1009 = vmatpush2.msra.mxu0 0.0
        %1010 = vmatprep.subr.mxu0 0.0
        %1011 = vmatpush2.msra.mxu0 0.0
        %1012 = vmatprep.subr.mxu0 0.0
        %1013 = vmatpush2.msra.mxu0 0.0
        %1014 = vmatprep.mubr.f32.mxu0 0.0
        %1015 = vmatmul.mubr.f32.gmra.mxu0 %v948
        %v1016 = vpop.f32.mrf.mxu0
        %v1017 = vadd.f32 %v944, %v1016
        %v1018 = vpop.f32.mrf.mxu0
        %1019 = vdwg.mxu0
        %v1020 = vld [vmem:[%s5] sm:$0x1]
        %v1022 = vlaneseq
        %v1023 = vshrl.u32 %v1022, 7
        %v1024 = vsub.s32 0, %v1023
        %v1025 = vrot.slane %v1020, %v1024
        %v1027 = vadd.f32 %v1017, %v1025
        %1028 = vst.msk [vmem:[%s334] sm:$0xff] %vm363, %v1027
        %s1029 = sand.u32 %s170, 1
        %s1030 = scalar_lea.sflag [#allocation4], %s1029
        %s1031 = sand.u32 %s170, 1
        %s1032 = smul.addr %s1031, 8
        %s1033 = scalar_lea.vmem [#allocation8], %s1032
        %p1034 = scmp.lt.s32.totalorder %s26, 1
        %s1035 = scalar_select %p1034, %s26, 1
        %s1036 = smul.addr %s1035, 2
        %s1037 = smul.addr %s1036, 8
        %s1038 = scalar_lea.vmem %s7, %s1037
        // Predicated region
        $region57: #{multi_head_attention.1} parent=43 // pred_check
          %p1039 = pneg %p180
        $region58: #{multi_head_attention.1} parent=43 // pred_check_branch
          %1041 = sbr.rel (%p1039) target = $region60
        $region59: #{multi_head_attention.1} parent=43 // pred_region
          %s1043 = ssub.s32 128, 128
          %1044 = vsyncadd %s1030, %s1043
          %s1045 = smul.addr %s26, 128
          %s1046 = scalar_lea.hbm %s6, %s1045
          %s1048 = sshll.u32 %s1033, 4
          %s1049 = int_to_ptr.vmem [resolvable:$true] %s1048
          %1051 = dma.vmem_to_hbm [thread:$0]  %s1049, 128, %s1046, %s1030
        $region60: #{multi_head_attention.1} parent=43 // pred_fallthru
          _
        // Predicated region
        $region61: #{multi_head_attention.1} parent=43 // pred_check
          %p1052 = pneg %p206
        $region62: #{multi_head_attention.1} parent=43 // pred_check_branch
          %1054 = sbr.rel (%p1052) target = $region64
        $region63: #{multi_head_attention.1} parent=43 // pred_region
          _
        $region64: #{multi_head_attention.1} parent=43 // pred_fallthru
          _
      $region44: #{multi_head_attention.1} parent=5 // pred_fallthru
        _
      %p1055 = scmp.le.s32.totalorder 2, %s21
      // Predicated region
      $region65: #{multi_head_attention.1} parent=5 // pred_check
        %p1056 = pneg %p1055
      $region66: #{multi_head_attention.1} parent=5 // pred_check_branch
        %1058 = sbr.rel (%p1056) target = $region68
      $region67: #{multi_head_attention.1} parent=5 // pred_region
        %s1059 = ssub.s32 %s21, 2
        // Predicated region
        $region69: #{multi_head_attention.1} parent=67 // pred_check
          %p1060 = pneg %p186
        $region70: #{multi_head_attention.1} parent=67 // pred_check_branch
          %1062 = sbr.rel (%p1060) target = $region72
        $region71: #{multi_head_attention.1} parent=67 // pred_region
          %s1063 = sand.u32 %s171, 1
          %s1064 = scalar_lea.sflag [#allocation4], %s1063
          %s1065 = sand.u32 %s171, 1
          %s1066 = smul.addr %s1065, 8
          %s1067 = scalar_lea.vmem [#allocation8], %s1066
          %1068 = dma.done %s1064, 128
        $region72: #{multi_head_attention.1} parent=67 // pred_fallthru
          _
        // Predicated region
        $region73: #{multi_head_attention.1} parent=67 // pred_check
          %p1069 = pneg %p212
        $region74: #{multi_head_attention.1} parent=67 // pred_check_branch
          %1071 = sbr.rel (%p1069) target = $region76
        $region75: #{multi_head_attention.1} parent=67 // pred_region
          %p1072 = scmp.lt.s32.totalorder %s27, 1
          %s1073 = scalar_select %p1072, %s27, 1
          %s1074 = smul.addr %s1073, 2
          %s1075 = smul.addr %s1074, 8
          %s1076 = scalar_lea.vmem %s7, %s1075
        $region76: #{multi_head_attention.1} parent=67 // pred_fallthru
          _
      $region68: #{multi_head_attention.1} parent=5 // pred_fallthru
        _
    $region6: #{multi_head_attention.1} parent=1 // loop_footer
      %s25 = sadd.s32 1, %s21
    $region7: #{multi_head_attention.1} parent=1 // loop_footer_branch
      %20 = sbr.rel target = $region3
    $region8: #{multi_head_attention.1} parent=1 // loop_exit
      _
    %1077 = vsyncpa [#allocation3], 1
    %s1078 = scalar_lea.sflag [#allocation3], 1
    %1079 = vsyncpa %s1078, 1
    %1080 = vsyncpa [#allocation6], 1
    %1081 = vsyncpa [#allocation4], 1
    %s1082 = scalar_lea.sflag [#allocation4], 1
    %1083 = vsyncpa %s1082, 1

</llo_original>
